<compile_context>
chip_gen: v7x
topology: tpu7x:2x2x1
jax: 0.10.0
libtpu: 0.0.40
codegen_flags: <defaults>
</compile_context>

<pallas_src>
import functools
import math

import jax
import jax.numpy as jnp
from jax import lax
from jax.experimental import pallas as pl
from jax.experimental.pallas import tpu as pltpu

_LANE = 128


def _round_up(x: int, m: int) -> int:
    return ((x + m - 1) // m) * m


def _cdiv(a: int, b: int) -> int:
    return -(-a // b)


def _flash_sdpa_kernel(q_ref, k_ref, v_ref, o_ref, q_sc, m_sc, l_sc, acc_sc,
                       *, scale, block_k, valid_sk, needs_mask, num_k_blocks):
    k_idx = pl.program_id(2)

    @pl.when(k_idx == 0)
    def _init():
        # Q tile is resident across the k axis; scale it exactly once per q tile.
        q_sc[...] = q_ref[...] * jnp.asarray(scale, dtype=q_ref.dtype)
        m_sc[...] = jnp.full_like(m_sc, -jnp.inf)
        l_sc[...] = jnp.zeros_like(l_sc)
        acc_sc[...] = jnp.zeros_like(acc_sc)

    # scores = (Q/sqrt(d)) @ K^T, contracting on D directly (no explicit transpose).
    s = lax.dot_general(q_sc[...], k_ref[...], (((1,), (1,)), ((), ())),
                        preferred_element_type=jnp.float32)       # (tq, tk) f32

    if needs_mask:  # static: Sk was padded up to a tile multiple
        def _mask(sc):
            key_pos = k_idx * block_k + lax.broadcasted_iota(jnp.int32, sc.shape, 1)
            return jnp.where(key_pos < valid_sk, sc, jnp.float32(-1e30))
        if num_k_blocks == 1:
            s = _mask(s)                      # single block: always the "last" one
        else:
            # Only the final k block can contain padded keys; skip the mask elsewhere.
            s = lax.cond(k_idx == num_k_blocks - 1, _mask, lambda sc: sc, s)

    m_prev = m_sc[...]                                            # (tq, 1)
    m_new = jnp.maximum(m_prev, jnp.max(s, axis=-1, keepdims=True))
    alpha = jnp.exp(m_prev - m_new)
    p = jnp.exp(s - m_new)                                        # (tq, tk) f32

    l_sc[...] = alpha * l_sc[...] + jnp.sum(p, axis=-1, keepdims=True)
    acc_sc[...] = alpha * acc_sc[...] + jnp.dot(
        p.astype(v_ref.dtype), v_ref[...], preferred_element_type=jnp.float32)
    m_sc[...] = m_new

    @pl.when(k_idx == num_k_blocks - 1)
    def _finalize():
        l = l_sc[...]
        inv_l = pl.reciprocal(l, approx=True)          # EUP slot
        inv_l = inv_l * (2.0 - l * inv_l)              # one Newton step -> f32 accuracy
        o_ref[...] = (acc_sc[...] * inv_l).astype(o_ref.dtype)


def scaled_dot_product_attention(Q, K, V, *, block_q=256, block_k=512,
                                 kv_resident_budget=16 * 2**20):
    """Pallas flash-attention implementation of the PyTorch ScaledDotProductAttention."""
    B, Sq, D = Q.shape
    Bk, Sk, Dk = K.shape
    assert B == Bk and D == Dk and V.shape == (B, Sk, D)

    itemsize = jnp.dtype(Q.dtype).itemsize
    # dtype-aware minimum sublane rows: 8 for f32, 16 for bf16, 32 for int8/fp8.
    sub = max(8, 32 // itemsize)
    D_pad = _round_up(D, _LANE)
    Sq_ceil = _round_up(Sq, sub)
    Sk_ceil = _round_up(Sk, sub)

    # ---- q tile: large to cut K/V HBM traffic; split so B*n_q >= 2 (v7x dual TC). ----
    tq = min(_round_up(block_q, sub), Sq_ceil)
    n_q = _cdiv(Sq_ceil, tq)
    if B * n_q < 2 and Sq_ceil >= 2 * max(sub, 128):
        tq = _round_up(_cdiv(Sq_ceil, 2), sub)
        n_q = _cdiv(Sq_ceil, tq)
    Sq_pad = n_q * tq

    # ---- k tile: keep K/V resident (single k block) when they fit the VMEM budget. ----
    kv_resident_bytes = 2 * 2 * Sk_ceil * D_pad * itemsize   # K+V, double-buffered
    if kv_resident_bytes <= kv_resident_budget:
        tk = Sk_ceil
    else:
        tk = min(_round_up(block_k, sub), Sk_ceil)
    n_k = _cdiv(Sk_ceil, tk)
    Sk_pad = n_k * tk
    needs_mask = Sk_pad != Sk

    def _pad(x, s_pad):
        s, d = x.shape[1], x.shape[2]
        if s == s_pad and d == D_pad:
            return x
        return jnp.pad(x, ((0, 0), (0, s_pad - s), (0, D_pad - d)))

    Qp = _pad(Q, Sq_pad)
    Kp = _pad(K, Sk_pad)
    Vp = _pad(V, Sk_pad)

    grid = (B, n_q, n_k)

    kernel = functools.partial(
        _flash_sdpa_kernel,
        scale=1.0 / math.sqrt(D),
        block_k=tk,
        valid_sk=Sk,
        needs_mask=needs_mask,
        num_k_blocks=n_k,
    )

    # ---- VMEM accounting (tiles double-buffered + scratch + in-kernel f32 temps). ----
    f32b = 4
    tile_bytes = 2 * itemsize * D_pad * (2 * tq + 2 * tk)       # Q, O, K, V blocks
    scratch_bytes = (tq * D_pad * itemsize                       # scaled-Q scratch
                     + tq * D_pad * f32b                         # accumulator
                     + 2 * tq * _LANE * f32b)                    # m, l (lane-padded)
    temp_bytes = 3 * tq * tk * f32b                              # s, p, p-cast temps
    need = tile_bytes + scratch_bytes + temp_bytes
    try:
        cap = int(pltpu.get_tpu_info().vmem_capacity_bytes)
    except Exception:
        cap = 64 * 2**20                                         # smallest (v7x per-TC)
    vmem_limit = int(min(int(0.9 * cap), max(32 * 2**20, 2 * need)))

    kv_passes = 1 if n_k == 1 else n_q   # resident K/V is fetched once per batch
    cost = pl.CostEstimate(
        flops=4 * B * Sq_pad * Sk_pad * D_pad,
        transcendentals=B * Sq_pad * Sk_pad,
        bytes_accessed=itemsize * (2 * B * Sq_pad * D_pad
                                   + 2 * kv_passes * B * Sk_pad * D_pad),
    )

    out = pl.pallas_call(
        kernel,
        out_shape=jax.ShapeDtypeStruct((B, Sq_pad, D_pad), Q.dtype),
        grid_spec=pltpu.PrefetchScalarGridSpec(
            num_scalar_prefetch=0,
            grid=grid,
            in_specs=[
                pl.BlockSpec((pl.Squeezed(), tq, D_pad), lambda b, i, k: (b, i, 0)),
                pl.BlockSpec((pl.Squeezed(), tk, D_pad), lambda b, i, k: (b, k, 0)),
                pl.BlockSpec((pl.Squeezed(), tk, D_pad), lambda b, i, k: (b, k, 0)),
            ],
            out_specs=pl.BlockSpec((pl.Squeezed(), tq, D_pad), lambda b, i, k: (b, i, 0)),
            scratch_shapes=[
                pltpu.VMEM((tq, D_pad), Q.dtype),      # pre-scaled Q tile
                pltpu.VMEM((tq, 1), jnp.float32),      # running max m
                pltpu.VMEM((tq, 1), jnp.float32),      # running denom l
                pltpu.VMEM((tq, D_pad), jnp.float32),  # running accumulator
            ],
        ),
        compiler_params=pltpu.CompilerParams(
            dimension_semantics=("parallel", "parallel", "arbitrary"),
            vmem_limit_bytes=vmem_limit,
        ),
        cost_estimate=cost,
    )(Qp, Kp, Vp)

    if Sq_pad != Sq or D_pad != D:
        out = out[:, :Sq, :D]
    return out


def _reference(Q, K, V):
    d = Q.shape[2]
    scores = jnp.einsum("bqd,bkd->bqk", Q, K) / jnp.sqrt(jnp.float32(d))
    attn = jax.nn.softmax(scores, axis=-1)
    return jnp.einsum("bqk,bkd->bqd", attn, V)


if __name__ == "__main__":
    key = jax.random.PRNGKey(0)
    kq, kk, kv = jax.random.split(key, 3)

    # Shapes matching the PyTorch module's (batch, seq, dim) convention.
    B, Sq, Sk, D = 2, 8, 8, 32
    Q = jax.random.normal(kq, (B, Sq, D), dtype=jnp.float32)
    K = jax.random.normal(kk, (B, Sk, D), dtype=jnp.float32)
    V = jax.random.normal(kv, (B, Sk, D), dtype=jnp.float32)

    out = jax.block_until_ready(scaled_dot_product_attention(Q, K, V))
    assert out.shape == (B, Sq, D)
    assert jnp.allclose(out, _reference(Q, K, V), atol=1e-4, rtol=1e-4), "mismatch (small)"

    # Second check: streamed (non-resident) K/V -> multi-block online softmax with the
    # last-block-only key-padding mask path.
    kq2, kk2, kv2 = jax.random.split(jax.random.PRNGKey(1), 3)
    B2, Sq2, Sk2, D2 = 2, 40, 72, 32
    Q2 = jax.random.normal(kq2, (B2, Sq2, D2), dtype=jnp.float32)
    K2 = jax.random.normal(kk2, (B2, Sk2, D2), dtype=jnp.float32)
    V2 = jax.random.normal(kv2, (B2, Sk2, D2), dtype=jnp.float32)
    out2 = jax.block_until_ready(
        scaled_dot_product_attention(Q2, K2, V2, block_q=16, block_k=32,
                                     kv_resident_budget=0))
    assert out2.shape == (B2, Sq2, D2)
    assert jnp.allclose(out2, _reference(Q2, K2, V2), atol=1e-4, rtol=1e-4), "mismatch (tiled)"

    print("KERNEL_OK")
</pallas_src>

<mosaic_0001>
module attributes {stable_mosaic.version = 11 : i64} {
  func.func @_flash_sdpa_kernel(%arg0: i32, %arg1: i32, %arg2: i32, %arg3: memref<1x8x128xf32, #tpu.memory_space<vmem>>, %arg4: memref<1x8x128xf32, #tpu.memory_space<vmem>>, %arg5: memref<1x8x128xf32, #tpu.memory_space<vmem>>, %arg6: memref<1x8x128xf32, #tpu.memory_space<vmem>>, %arg7: memref<8x128xf32, #tpu.memory_space<vmem>>, %arg8: memref<8x1xf32, #tpu.memory_space<vmem>>, %arg9: memref<8x1xf32, #tpu.memory_space<vmem>>, %arg10: memref<8x128xf32, #tpu.memory_space<vmem>>) attributes {dimension_semantics = [#tpu.dimension_semantics<parallel>, #tpu.dimension_semantics<parallel>, #tpu.dimension_semantics<arbitrary>], iteration_bounds = array<i64: 2, 1, 1>, scalar_prefetch = 0 : i64, scratch_operands = 4 : i64, tpu.core_type = #tpu.core_type<tc>, window_params = [{transform_indices = @transform_0, window_bounds = array<i64: 1, 8, 128>}, {transform_indices = @transform_1, window_bounds = array<i64: 1, 8, 128>}, {transform_indices = @transform_2, window_bounds = array<i64: 1, 8, 128>}, {transform_indices = @transform_3, window_bounds = array<i64: 1, 8, 128>}]} {
    %c0_i32 = arith.constant 0 : i32
    %0 = arith.cmpi eq, %arg2, %c0_i32 : i32
    %1 = arith.extui %0 : i1 to i32
    %c0_i32_0 = arith.constant 0 : i32
    %2 = arith.cmpi ne, %1, %c0_i32_0 : i32
    scf.if %2 {
      %c0_25 = arith.constant 0 : index
      %c0_26 = arith.constant 0 : index
      %c0_27 = arith.constant 0 : index
      %34 = vector.load %arg3[%c0_25, %c0_26, %c0_27] : memref<1x8x128xf32, #tpu.memory_space<vmem>>, vector<1x8x128xf32>
      %35 = vector.shape_cast %34 : vector<1x8x128xf32> to vector<8x128xf32>
      %cst_28 = arith.constant 0.176776692 : f32
      %36 = vector.broadcast %cst_28 : f32 to vector<8x128xf32>
      %37 = arith.mulf %35, %36 : vector<8x128xf32>
      %c0_29 = arith.constant 0 : index
      %c0_30 = arith.constant 0 : index
      %38 = vector.load %arg7[%c0_29, %c0_30] : memref<8x128xf32, #tpu.memory_space<vmem>>, vector<8x128xf32>
      tpu.vector_store %arg7[%c0_29, %c0_30], %37 {strides = array<i32>} : memref<8x128xf32, #tpu.memory_space<vmem>>, vector<8x128xf32>,
      %cst_31 = arith.constant 0xFF800000 : f32
      %39 = vector.broadcast %cst_31 : f32 to vector<8x1xf32>
      %c0_32 = arith.constant 0 : index
      %c0_33 = arith.constant 0 : index
      %40 = vector.load %arg8[%c0_32, %c0_33] : memref<8x1xf32, #tpu.memory_space<vmem>>, vector<8x1xf32>
      tpu.vector_store %arg8[%c0_32, %c0_33], %39 {strides = array<i32>} : memref<8x1xf32, #tpu.memory_space<vmem>>, vector<8x1xf32>,
      %cst_34 = arith.constant 0.000000e+00 : f32
      %41 = vector.broadcast %cst_34 : f32 to vector<8x1xf32>
      %c0_35 = arith.constant 0 : index
      %c0_36 = arith.constant 0 : index
      %42 = vector.load %arg9[%c0_35, %c0_36] : memref<8x1xf32, #tpu.memory_space<vmem>>, vector<8x1xf32>
      tpu.vector_store %arg9[%c0_35, %c0_36], %41 {strides = array<i32>} : memref<8x1xf32, #tpu.memory_space<vmem>>, vector<8x1xf32>,
      %cst_37 = arith.constant 0.000000e+00 : f32
      %43 = vector.broadcast %cst_37 : f32 to vector<8x128xf32>
      %c0_38 = arith.constant 0 : index
      %c0_39 = arith.constant 0 : index
      %44 = vector.load %arg10[%c0_38, %c0_39] : memref<8x128xf32, #tpu.memory_space<vmem>>, vector<8x128xf32>
      tpu.vector_store %arg10[%c0_38, %c0_39], %43 {strides = array<i32>} : memref<8x128xf32, #tpu.memory_space<vmem>>, vector<8x128xf32>,
    } else {
    }
    %c0 = arith.constant 0 : index
    %c0_1 = arith.constant 0 : index
    %3 = vector.load %arg7[%c0, %c0_1] : memref<8x128xf32, #tpu.memory_space<vmem>>, vector<8x128xf32>
    %c0_2 = arith.constant 0 : index
    %c0_3 = arith.constant 0 : index
    %c0_4 = arith.constant 0 : index
    %4 = vector.load %arg4[%c0_2, %c0_3, %c0_4] : memref<1x8x128xf32, #tpu.memory_space<vmem>>, vector<1x8x128xf32>
    %5 = vector.shape_cast %4 : vector<1x8x128xf32> to vector<8x128xf32>
    %cst = arith.constant dense<0.000000e+00> : vector<8x8xf32>
    %6 = tpu.matmul %3, %5, %cst {dimension_numbers = #tpu.dot_dimension_numbers<[1], [1], [0], [0], [0, 0, 1, 0], [], []>} : vector<8x128xf32>, vector<8x128xf32>, vector<8x8xf32> -> vector<8x8xf32>
    %c0_5 = arith.constant 0 : index
    %c0_6 = arith.constant 0 : index
    %7 = vector.load %arg8[%c0_5, %c0_6] : memref<8x1xf32, #tpu.memory_space<vmem>>, vector<8x1xf32>
    %cst_7 = arith.constant dense<0xFF800000> : vector<8xf32>
    %8 = vector.multi_reduction <maximumf>, %6, %cst_7 [1] : vector<8x8xf32> to vector<8xf32>
    %9 = vector.shape_cast %8 : vector<8xf32> to vector<8x1xf32>
    %10 = arith.maximumf %7, %9 : vector<8x1xf32>
    %11 = arith.subf %7, %10 : vector<8x1xf32>
    %12 = math.exp %11 : vector<8x1xf32>
    %13 = vector.broadcast %10 : vector<8x1xf32> to vector<8x8xf32>
    %14 = arith.subf %6, %13 : vector<8x8xf32>
    %15 = math.exp %14 : vector<8x8xf32>
    %c0_8 = arith.constant 0 : index
    %c0_9 = arith.constant 0 : index
    %16 = vector.load %arg9[%c0_8, %c0_9] : memref<8x1xf32, #tpu.memory_space<vmem>>, vector<8x1xf32>
    %17 = arith.mulf %12, %16 : vector<8x1xf32>
    %cst_10 = arith.constant dense<0.000000e+00> : vector<8xf32>
    %18 = vector.multi_reduction <add>, %15, %cst_10 [1] : vector<8x8xf32> to vector<8xf32>
    %19 = vector.shape_cast %18 : vector<8xf32> to vector<8x1xf32>
    %20 = arith.addf %17, %19 : vector<8x1xf32>
    %c0_11 = arith.constant 0 : index
    %c0_12 = arith.constant 0 : index
    %21 = vector.load %arg9[%c0_11, %c0_12] : memref<8x1xf32, #tpu.memory_space<vmem>>, vector<8x1xf32>
    tpu.vector_store %arg9[%c0_11, %c0_12], %20 {strides = array<i32>} : memref<8x1xf32, #tpu.memory_space<vmem>>, vector<8x1xf32>,
    %c0_13 = arith.constant 0 : index
    %c0_14 = arith.constant 0 : index
    %22 = vector.load %arg10[%c0_13, %c0_14] : memref<8x128xf32, #tpu.memory_space<vmem>>, vector<8x128xf32>
    %23 = vector.broadcast %12 : vector<8x1xf32> to vector<8x128xf32>
    %24 = arith.mulf %23, %22 : vector<8x128xf32>
    %c0_15 = arith.constant 0 : index
    %c0_16 = arith.constant 0 : index
    %c0_17 = arith.constant 0 : index
    %25 = vector.load %arg5[%c0_15, %c0_16, %c0_17] : memref<1x8x128xf32, #tpu.memory_space<vmem>>, vector<1x8x128xf32>
    %26 = vector.shape_cast %25 : vector<1x8x128xf32> to vector<8x128xf32>
    %cst_18 = arith.constant dense<0.000000e+00> : vector<8x128xf32>
    %27 = tpu.matmul %15, %26, %cst_18 {dimension_numbers = #tpu.dot_dimension_numbers<[1], [0], [0], [1], [0, 0, 1, 1], [], []>} : vector<8x8xf32>, vector<8x128xf32>, vector<8x128xf32> -> vector<8x128xf32>
    %28 = arith.addf %24, %27 : vector<8x128xf32>
    %c0_19 = arith.constant 0 : index
    %c0_20 = arith.constant 0 : index
    %29 = vector.load %arg10[%c0_19, %c0_20] : memref<8x128xf32, #tpu.memory_space<vmem>>, vector<8x128xf32>
    tpu.vector_store %arg10[%c0_19, %c0_20], %28 {strides = array<i32>} : memref<8x128xf32, #tpu.memory_space<vmem>>, vector<8x128xf32>,
    %c0_21 = arith.constant 0 : index
    %c0_22 = arith.constant 0 : index
    %30 = vector.load %arg8[%c0_21, %c0_22] : memref<8x1xf32, #tpu.memory_space<vmem>>, vector<8x1xf32>
    tpu.vector_store %arg8[%c0_21, %c0_22], %10 {strides = array<i32>} : memref<8x1xf32, #tpu.memory_space<vmem>>, vector<8x1xf32>,
    %c0_i32_23 = arith.constant 0 : i32
    %31 = arith.cmpi eq, %arg2, %c0_i32_23 : i32
    %32 = arith.extui %31 : i1 to i32
    %c0_i32_24 = arith.constant 0 : i32
    %33 = arith.cmpi ne, %32, %c0_i32_24 : i32
    scf.if %33 {
      %c0_25 = arith.constant 0 : index
      %c0_26 = arith.constant 0 : index
      %34 = vector.load %arg9[%c0_25, %c0_26] : memref<8x1xf32, #tpu.memory_space<vmem>>, vector<8x1xf32>
      %35 = tpu.reciprocal %34 {approx = true} : vector<8x1xf32> -> vector<8x1xf32>
      %36 = arith.mulf %34, %35 : vector<8x1xf32>
      %cst_27 = arith.constant 2.000000e+00 : f32
      %37 = vector.broadcast %cst_27 : f32 to vector<8x1xf32>
      %38 = arith.subf %37, %36 : vector<8x1xf32>
      %39 = arith.mulf %35, %38 : vector<8x1xf32>
      %c0_28 = arith.constant 0 : index
      %c0_29 = arith.constant 0 : index
      %40 = vector.load %arg10[%c0_28, %c0_29] : memref<8x128xf32, #tpu.memory_space<vmem>>, vector<8x128xf32>
      %41 = vector.broadcast %39 : vector<8x1xf32> to vector<8x128xf32>
      %42 = arith.mulf %40, %41 : vector<8x128xf32>
      %c0_30 = arith.constant 0 : index
      %c0_31 = arith.constant 0 : index
      %c0_32 = arith.constant 0 : index
      %43 = vector.load %arg6[%c0_30, %c0_31, %c0_32] : memref<1x8x128xf32, #tpu.memory_space<vmem>>, vector<1x8x128xf32>
      %44 = vector.shape_cast %43 : vector<1x8x128xf32> to vector<8x128xf32>
      %45 = vector.shape_cast %42 : vector<8x128xf32> to vector<1x8x128xf32>
      tpu.vector_store %arg6[%c0_30, %c0_31, %c0_32], %45 {strides = array<i32>} : memref<1x8x128xf32, #tpu.memory_space<vmem>>, vector<1x8x128xf32>,
    } else {
    }
    return
  }
  func.func @transform_0(%arg0: i32, %arg1: i32, %arg2: i32) -> (i32, i32, i32) {
    %c0_i32 = arith.constant 0 : i32
    %c0_i32_0 = arith.constant 0 : i32
    return %arg0, %arg1, %c0_i32 : i32, i32, i32
  }
  func.func @transform_1(%arg0: i32, %arg1: i32, %arg2: i32) -> (i32, i32, i32) {
    %c0_i32 = arith.constant 0 : i32
    %c0_i32_0 = arith.constant 0 : i32
    return %arg0, %arg2, %c0_i32 : i32, i32, i32
  }
  func.func @transform_2(%arg0: i32, %arg1: i32, %arg2: i32) -> (i32, i32, i32) {
    %c0_i32 = arith.constant 0 : i32
    %c0_i32_0 = arith.constant 0 : i32
    return %arg0, %arg2, %c0_i32 : i32, i32, i32
  }
  func.func @transform_3(%arg0: i32, %arg1: i32, %arg2: i32) -> (i32, i32, i32) {
    %c0_i32 = arith.constant 0 : i32
    %c0_i32_0 = arith.constant 0 : i32
    return %arg0, %arg1, %c0_i32 : i32, i32, i32
  }
}

</mosaic_0001>

<llo_original>
// kernel: tpu_custom_call.1
$region0: #{tpu_custom_call.1}
  #allocation0 [shape = 'u32[]', space=smem, size = 0x4, offset = 0x4, fixed_abs, tag = 'smem constant byte address 0x4 - core index']
  #allocation1 [shape = 'u32[144,128]{1,0:T(1,128)}', space=vmem, size = 0x12000, scoped, tag = 'internal scratch']
  #allocation2 [shape = 'f32[8,128]{1,0:T(8,128)}', space=vmem, size = 0x1000, scoped, tag = 'scratch operand']
  #allocation3 [shape = 'f32[8,1]{1,0:T(8,128)}', space=vmem, size = 0x1000, scoped, tag = 'scratch operand']
  #allocation4 [shape = 'f32[8,1]{1,0:T(8,128)}', space=vmem, size = 0x1000, scoped, tag = 'scratch operand']
  #allocation5 [shape = 'f32[8,128]{1,0:T(8,128)}', space=vmem, size = 0x1000, scoped, tag = 'scratch operand']
  %s0 = inlined_call_operand.hbm [shape: f32[2,8,128], index: 0, kind: input, shape index: {}]
  %s1 = inlined_call_operand.hbm [shape: f32[2,8,128], index: 1, kind: input, shape index: {}]
  %s2 = inlined_call_operand.hbm [shape: f32[2,8,128], index: 2, kind: input, shape index: {}]
  %s3 = inlined_call_operand.hbm [shape: f32[2,8,128], index: 3, kind: output, shape index: {}]
  %s4 = sld [smem:[#allocation0]]
  $region65: #{tpu_custom_call.1} parent=0
    _
  %s6 = ssub.s32 1, %s4
  %s7 = scalar_select 0, %s6, %s4
  $region1: #{tpu_custom_call.1} parent=0
    #allocation6 [shape = 'u8[8192]{0}', space=vmem, size = 0x2000, scoped, tag = 'input window, operand 0']
    #allocation7 [shape = 's32[2]{0}', space=sflag, size = 0x8, scoped, tag = 'scoped memory for tpu_custom_call.1']
    #allocation8 [shape = 's32[2]{0}', space=sflag, size = 0x8, scoped, tag = 'scoped memory for tpu_custom_call.1']
    #allocation9 [shape = 'u8[8192]{0}', space=vmem, size = 0x2000, scoped, tag = 'input window, operand 1']
    #allocation10 [shape = 's32[2]{0}', space=sflag, size = 0x8, scoped, tag = 'scoped memory for tpu_custom_call.1']
    #allocation11 [shape = 'u8[8192]{0}', space=vmem, size = 0x2000, scoped, tag = 'input window, operand 2']
    #allocation12 [shape = 'u8[8192]{0}', space=vmem, size = 0x2000, scoped, tag = 'output window, operand 0']
    %8 = vsyncpa [#allocation7], 0
    %s9 = scalar_lea.sflag [#allocation7], 1
    %10 = vsyncpa %s9, 0
    %11 = vsyncpa [#allocation10], 0
    %s12 = scalar_lea.sflag [#allocation10], 1
    %13 = vsyncpa %s12, 0
    %14 = vsyncpa [#allocation8], 0
    %s15 = scalar_lea.sflag [#allocation8], 1
    %16 = vsyncpa %s15, 0
    loop: start=0, step=1, limit=4
    $region2: #{tpu_custom_call.1} parent=1 // loop_pre_header
      _
    $region3: #{tpu_custom_call.1} parent=1 // loop_header
      %s18 = sphi 0, %s22
      %p19 = scmp.ge.s32.totalorder %s18, 4
      %s25 = sphi 0, %s44
      %s26 = sphi 0, %s40
      %s27 = sphi 0, %s36
      %s28 = sphi 0, %s25
      %s29 = sphi 0, %s26
      %s30 = sphi 0, %s27
      %s31 = sphi 0, %s28
      %s32 = sphi 0, %s29
      %s33 = sphi 0, %s30
      %s49 = sphi 0, %s51
      %s52 = sphi 0, %s49
      %s53 = sphi 0, %s52
      %s69 = sphi 0, %s53
      %s77 = sphi 0, %s79
      %s80 = sphi 0, %s77
      %s81 = sphi 0, %s80
      %s97 = sphi 0, %s81
      %s105 = sphi 0, %s107
      %s108 = sphi 0, %s105
      %s109 = sphi 0, %s108
      %s125 = sphi 0, %s109
      %s133 = sphi 0, %s135
      %s136 = sphi 0, %s133
      %s137 = sphi 0, %s136
      %s153 = sphi 0, %s137
    $region4: #{tpu_custom_call.1} parent=1 // loop_header_branch
      %21 = sbr.rel (%p19) target = $region8
    $region5: #{tpu_custom_call.1} parent=1 // loop_body
      %s23 = ssub.s32 %s18, 1
      %s24 = ssub.s32 %s18, 2
      %s34 = sadd.s32 1, %s27
      %p35 = scmp.ge.s32.totalorder %s34, 1
      %s36 = scalar_select %p35, 0, %s34
      %s37 = sadd.s32 1, %s26
      %s38 = scalar_select %p35, %s37, %s26
      %p39 = scmp.ge.s32.totalorder %s38, 1
      %s40 = scalar_select %p39, 0, %s38
      %s41 = sadd.s32 1, %s25
      %s42 = scalar_select %p39, %s41, %s25
      %p43 = scmp.ge.s32.totalorder %s42, 2
      %s44 = scalar_select %p43, 0, %s42
      %s45 = ssub.s32 %s25, %s44
      %s46 = ssub.s32 %s26, %s40
      %s47 = sor.u32 %s45, %s46
      %p48 = scmp.eq.s32.totalorder %s47, 0
      %s50 = sadd.s32 %s49, 1
      %s51 = scalar_select %p48, %s49, %s50
      %p54 = pneg %p48
      %p55 = scmp.eq.s32.totalorder %s18, 1
      %p56 = por %p54, %p55
      %p57 = scmp.ne.s32.totalorder %s49, %s52
      %p58 = scmp.eq.s32.totalorder %s18, 0
      %p59 = por %p57, %p58
      %p60 = scmp.ne.s32.totalorder %s49, %s52
      %p61 = scmp.eq.s32.totalorder %s23, 1
      %p62 = por %p60, %p61
      %p63 = scmp.ne.s32.totalorder %s52, %s53
      %p64 = scmp.eq.s32.totalorder %s23, 0
      %p65 = por %p63, %p64
      %p66 = scmp.ne.s32.totalorder %s52, %s53
      %p67 = scmp.eq.s32.totalorder %s24, 1
      %p68 = por %p66, %p67
      %p70 = scmp.ne.s32.totalorder %s53, %s69
      %p71 = scmp.eq.s32.totalorder %s24, 0
      %p72 = por %p70, %p71
      %s73 = ssub.s32 %s25, %s44
      %s74 = ssub.s32 %s27, %s36
      %s75 = sor.u32 %s73, %s74
      %p76 = scmp.eq.s32.totalorder %s75, 0
      %s78 = sadd.s32 %s77, 1
      %s79 = scalar_select %p76, %s77, %s78
      %p82 = pneg %p76
      %p83 = scmp.eq.s32.totalorder %s18, 1
      %p84 = por %p82, %p83
      %p85 = scmp.ne.s32.totalorder %s77, %s80
      %p86 = scmp.eq.s32.totalorder %s18, 0
      %p87 = por %p85, %p86
      %p88 = scmp.ne.s32.totalorder %s77, %s80
      %p89 = scmp.eq.s32.totalorder %s23, 1
      %p90 = por %p88, %p89
      %p91 = scmp.ne.s32.totalorder %s80, %s81
      %p92 = scmp.eq.s32.totalorder %s23, 0
      %p93 = por %p91, %p92
      %p94 = scmp.ne.s32.totalorder %s80, %s81
      %p95 = scmp.eq.s32.totalorder %s24, 1
      %p96 = por %p94, %p95
      %p98 = scmp.ne.s32.totalorder %s81, %s97
      %p99 = scmp.eq.s32.totalorder %s24, 0
      %p100 = por %p98, %p99
      %s101 = ssub.s32 %s25, %s44
      %s102 = ssub.s32 %s27, %s36
      %s103 = sor.u32 %s101, %s102
      %p104 = scmp.eq.s32.totalorder %s103, 0
      %s106 = sadd.s32 %s105, 1
      %s107 = scalar_select %p104, %s105, %s106
      %p110 = pneg %p104
      %p111 = scmp.eq.s32.totalorder %s18, 1
      %p112 = por %p110, %p111
      %p113 = scmp.ne.s32.totalorder %s105, %s108
      %p114 = scmp.eq.s32.totalorder %s18, 0
      %p115 = por %p113, %p114
      %p116 = scmp.ne.s32.totalorder %s105, %s108
      %p117 = scmp.eq.s32.totalorder %s23, 1
      %p118 = por %p116, %p117
      %p119 = scmp.ne.s32.totalorder %s108, %s109
      %p120 = scmp.eq.s32.totalorder %s23, 0
      %p121 = por %p119, %p120
      %p122 = scmp.ne.s32.totalorder %s108, %s109
      %p123 = scmp.eq.s32.totalorder %s24, 1
      %p124 = por %p122, %p123
      %p126 = scmp.ne.s32.totalorder %s109, %s125
      %p127 = scmp.eq.s32.totalorder %s24, 0
      %p128 = por %p126, %p127
      %s129 = ssub.s32 %s25, %s44
      %s130 = ssub.s32 %s26, %s40
      %s131 = sor.u32 %s129, %s130
      %p132 = scmp.eq.s32.totalorder %s131, 0
      %s134 = sadd.s32 %s133, 1
      %s135 = scalar_select %p132, %s133, %s134
      %p138 = pneg %p132
      %p139 = scmp.eq.s32.totalorder %s18, 1
      %p140 = por %p138, %p139
      %p141 = scmp.ne.s32.totalorder %s133, %s136
      %p142 = scmp.eq.s32.totalorder %s18, 0
      %p143 = por %p141, %p142
      %p144 = scmp.ne.s32.totalorder %s133, %s136
      %p145 = scmp.eq.s32.totalorder %s23, 1
      %p146 = por %p144, %p145
      %p147 = scmp.ne.s32.totalorder %s136, %s137
      %p148 = scmp.eq.s32.totalorder %s23, 0
      %p149 = por %p147, %p148
      %p150 = scmp.ne.s32.totalorder %s136, %s137
      %p151 = scmp.eq.s32.totalorder %s24, 1
      %p152 = por %p150, %p151
      %p154 = scmp.ne.s32.totalorder %s137, %s153
      %p155 = scmp.eq.s32.totalorder %s24, 0
      %p156 = por %p154, %p155
      %p157 = scmp.le.s32.totalorder 1, %s18
      %p158 = scmp.lt.s32.totalorder %s18, 3
      %p159 = pnand %p157, %p158
      %p160 = pneg %p159
      // Predicated region
      $region9: #{tpu_custom_call.1} parent=5 // pred_check
        _
      $region10: #{tpu_custom_call.1} parent=5 // pred_check_branch
        %162 = sbr.rel (%p159) target = $region12
      $region11: #{tpu_custom_call.1} parent=5 // pred_region
        %s163 = ssub.s32 %s18, 1
      $region12: #{tpu_custom_call.1} parent=5 // pred_fallthru
        _
      %p164 = scmp.lt.s32.totalorder %s18, 2
      // Predicated region
      $region13: #{tpu_custom_call.1} parent=5 // pred_check
        %p165 = pneg %p164
      $region14: #{tpu_custom_call.1} parent=5 // pred_check_branch
        %167 = sbr.rel (%p165) target = $region16
      $region15: #{tpu_custom_call.1} parent=5 // pred_region
        // Predicated region
        $region17: #{tpu_custom_call.1} parent=15 // pred_check
          %p168 = pneg %p59
        $region18: #{tpu_custom_call.1} parent=15 // pred_check_branch
          %170 = sbr.rel (%p168) target = $region20
        $region19: #{tpu_custom_call.1} parent=15 // pred_region
          %s171 = sand.u32 %s49, 1
          %s172 = scalar_lea.sflag [#allocation7], %s171
          %s173 = sand.u32 %s49, 1
          %s174 = smul.addr %s173, 8
          %s175 = scalar_lea.vmem [#allocation6], %s174
          %s177 = ssub.s32 128, 128
          %178 = vsyncadd %s172, %s177
          %s179 = sadd.s32 %s26, %s25
          %s180 = smul.addr %s179, 128
          %s181 = scalar_lea.hbm %s0, %s180
          %s183 = sshll.u32 %s175, 4
          %s184 = int_to_ptr.vmem [resolvable:$true] %s183
          %186 = dma.hbm_to_vmem [thread:$0]  %s181, 128, %s184, %s172
        $region20: #{tpu_custom_call.1} parent=15 // pred_fallthru
          _
        // Predicated region
        $region21: #{tpu_custom_call.1} parent=15 // pred_check
          %p187 = pneg %p87
        $region22: #{tpu_custom_call.1} parent=15 // pred_check_branch
          %189 = sbr.rel (%p187) target = $region24
        $region23: #{tpu_custom_call.1} parent=15 // pred_region
          %s190 = sand.u32 %s18, 1
          %s191 = scalar_lea.sflag [#allocation10], %s190
          %s192 = sand.u32 %s77, 1
          %s193 = smul.addr %s192, 8
          %s194 = scalar_lea.vmem [#allocation9], %s193
          %s196 = ssub.s32 128, 128
          %197 = vsyncadd %s191, %s196
          %s198 = sadd.s32 %s27, %s25
          %s199 = smul.addr %s198, 128
          %s200 = scalar_lea.hbm %s1, %s199
          %s202 = sshll.u32 %s194, 4
          %s203 = int_to_ptr.vmem [resolvable:$true] %s202
          %205 = dma.hbm_to_vmem [thread:$0]  %s200, 128, %s203, %s191
        $region24: #{tpu_custom_call.1} parent=15 // pred_fallthru
          _
        // Predicated region
        $region25: #{tpu_custom_call.1} parent=15 // pred_check
          %p206 = pneg %p115
        $region26: #{tpu_custom_call.1} parent=15 // pred_check_branch
          %208 = sbr.rel (%p206) target = $region28
        $region27: #{tpu_custom_call.1} parent=15 // pred_region
          %s209 = sand.u32 %s18, 1
          %s210 = scalar_lea.sflag [#allocation10], %s209
          %s211 = sand.u32 %s105, 1
          %s212 = smul.addr %s211, 8
          %s213 = scalar_lea.vmem [#allocation11], %s212
          %s215 = ssub.s32 128, 128
          %216 = vsyncadd %s210, %s215
          %s217 = sadd.s32 %s27, %s25
          %s218 = smul.addr %s217, 128
          %s219 = scalar_lea.hbm %s2, %s218
          %s221 = sshll.u32 %s213, 4
          %s222 = int_to_ptr.vmem [resolvable:$true] %s221
          %224 = dma.hbm_to_vmem [thread:$0]  %s219, 128, %s222, %s210
        $region28: #{tpu_custom_call.1} parent=15 // pred_fallthru
          _
      $region16: #{tpu_custom_call.1} parent=5 // pred_fallthru
        _
      %p225 = scmp.le.s32.totalorder 1, %s18
      %p226 = scmp.lt.s32.totalorder %s18, 3
      %p227 = pnand %p225, %p226
      %p228 = pneg %p227
      // Predicated region
      $region29: #{tpu_custom_call.1} parent=5 // pred_check
        _
      $region30: #{tpu_custom_call.1} parent=5 // pred_check_branch
        %230 = sbr.rel (%p227) target = $region32
      $region31: #{tpu_custom_call.1} parent=5 // pred_region
        %s231 = ssub.s32 %s18, 1
        %s232 = sand.u32 %s52, 1
        %s233 = scalar_lea.sflag [#allocation7], %s232
        %s234 = sand.u32 %s52, 1
        %s235 = smul.addr %s234, 8
        %s236 = scalar_lea.vmem [#allocation6], %s235
        // Predicated region
        $region33: #{tpu_custom_call.1} parent=31 // pred_check
          %p237 = pneg %p65
        $region34: #{tpu_custom_call.1} parent=31 // pred_check_branch
          %239 = sbr.rel (%p237) target = $region36
        $region35: #{tpu_custom_call.1} parent=31 // pred_region
          %240 = dma.done %s233, 128
        $region36: #{tpu_custom_call.1} parent=31 // pred_fallthru
          _
        %s241 = sand.u32 %s23, 1
        %s242 = scalar_lea.sflag [#allocation10], %s241
        %s243 = sand.u32 %s80, 1
        %s244 = smul.addr %s243, 8
        %s245 = scalar_lea.vmem [#allocation9], %s244
        // Predicated region
        $region37: #{tpu_custom_call.1} parent=31 // pred_check
          %p246 = pneg %p93
        $region38: #{tpu_custom_call.1} parent=31 // pred_check_branch
          %248 = sbr.rel (%p246) target = $region40
        $region39: #{tpu_custom_call.1} parent=31 // pred_region
          %249 = dma.done %s242, 128
        $region40: #{tpu_custom_call.1} parent=31 // pred_fallthru
          _
        %s250 = sand.u32 %s23, 1
        %s251 = scalar_lea.sflag [#allocation10], %s250
        %s252 = sand.u32 %s108, 1
        %s253 = smul.addr %s252, 8
        %s254 = scalar_lea.vmem [#allocation11], %s253
        // Predicated region
        $region41: #{tpu_custom_call.1} parent=31 // pred_check
          %p255 = pneg %p121
        $region42: #{tpu_custom_call.1} parent=31 // pred_check_branch
          %257 = sbr.rel (%p255) target = $region44
        $region43: #{tpu_custom_call.1} parent=31 // pred_region
          %258 = dma.done %s251, 128
        $region44: #{tpu_custom_call.1} parent=31 // pred_fallthru
          _
        %s259 = sand.u32 %s52, 1
        %s260 = scalar_lea.sflag [#allocation7], %s259
        %s261 = sand.u32 %s52, 1
        %s262 = smul.addr %s261, 8
        %s263 = scalar_lea.vmem [#allocation6], %s262
        %p264 = pneg %p65
        %p265 = pneg %p62
        %s266 = sand.u32 %s23, 1
        %s267 = scalar_lea.sflag [#allocation10], %s266
        %s268 = sand.u32 %s80, 1
        %s269 = smul.addr %s268, 8
        %s270 = scalar_lea.vmem [#allocation9], %s269
        %p271 = pneg %p93
        %p272 = pneg %p90
        %s273 = sand.u32 %s23, 1
        %s274 = scalar_lea.sflag [#allocation10], %s273
        %s275 = sand.u32 %s108, 1
        %s276 = smul.addr %s275, 8
        %s277 = scalar_lea.vmem [#allocation11], %s276
        %p278 = pneg %p121
        %p279 = pneg %p118
        %p280 = pneg %p149
        %p281 = pneg %p146
        %s282 = sand.u32 %s136, 1
        %s283 = scalar_lea.sflag [#allocation8], %s282
        %s284 = sand.u32 %s136, 1
        %s285 = smul.addr %s284, 8
        %s286 = scalar_lea.vmem [#allocation12], %s285
        %p287 = scmp.eq.s32.totalorder %s30, 0
        // Predicated region
        $region45: #{tpu_custom_call.1} parent=31 // pred_check
          %p288 = pneg %p287
        $region46: #{tpu_custom_call.1} parent=31 // pred_check_branch
          %290 = sbr.rel (%p288) target = $region48
        $region47: #{tpu_custom_call.1} parent=31 // pred_region
          %v291 = vld [vmem:[%s236] sm:$0xff]
          %v292 = vmul.f32 %v291, 0.17677669
          %293 = vst [vmem:[#allocation2] sm:$0xff] %v292
          %vm294 = vcmask 7168
          %295 = vst.msk [vmem:[#allocation3] sm:$0xff] %vm294, -inf
          %296 = vst.msk [vmem:[#allocation4] sm:$0xff] %vm294, 0.0
          %297 = vst [vmem:[#allocation5] sm:$0xff] 0.0
        $region48: #{tpu_custom_call.1} parent=31 // pred_fallthru
          _
        %v298 = vld [vmem:[#allocation2] sm:$0xff]
        %v299 = vld [vmem:[%s245] sm:$0xff]
        %300 = vmatprep.subr.mxu0 0.0
        %301 = vmatpush1.xpose.msra.mxu0 %v299
        %302 = vmatprep.subr.mxu0 0.0
        %303 = vmatpush1.xpose.msra.mxu0 0.0
        %304 = vmatprep.subr.mxu0 0.0
        %305 = vmatpush1.xpose.msra.mxu0 0.0
        %306 = vmatprep.subr.mxu0 0.0
        %307 = vmatpush1.xpose.msra.mxu0 0.0
        %308 = vmatprep.subr.mxu0 0.0
        %309 = vmatpush1.xpose.msra.mxu0 0.0
        %310 = vmatprep.subr.mxu0 0.0
        %311 = vmatpush1.xpose.msra.mxu0 0.0
        %312 = vmatprep.subr.mxu0 0.0
        %313 = vmatpush1.xpose.msra.mxu0 0.0
        %314 = vmatprep.subr.mxu0 0.0
        %315 = vmatpush1.xpose.msra.mxu0 0.0
        %316 = vmatprep.subr.mxu0 0.0
        %317 = vmatpush1.xpose.msra.mxu0 0.0
        %318 = vmatprep.subr.mxu0 0.0
        %319 = vmatpush1.xpose.msra.mxu0 0.0
        %320 = vmatprep.subr.mxu0 0.0
        %321 = vmatpush1.xpose.msra.mxu0 0.0
        %322 = vmatprep.subr.mxu0 0.0
        %323 = vmatpush1.xpose.msra.mxu0 0.0
        %324 = vmatprep.subr.mxu0 0.0
        %325 = vmatpush1.xpose.msra.mxu0 0.0
        %326 = vmatprep.subr.mxu0 0.0
        %327 = vmatpush1.xpose.msra.mxu0 0.0
        %328 = vmatprep.subr.mxu0 0.0
        %329 = vmatpush1.xpose.msra.mxu0 0.0
        %330 = vmatprep.subr.mxu0 0.0
        %331 = vmatpush1.xpose.msra.mxu0 0.0
        %332 = vmatprep.subr.mxu0 0.0
        %333 = vmatpush1.xpose.msra.mxu0 0.0
        %334 = vmatprep.subr.mxu0 0.0
        %335 = vmatpush1.xpose.msra.mxu0 0.0
        %336 = vmatprep.subr.mxu0 0.0
        %337 = vmatpush1.xpose.msra.mxu0 0.0
        %338 = vmatprep.subr.mxu0 0.0
        %339 = vmatpush1.xpose.msra.mxu0 0.0
        %340 = vmatprep.subr.mxu0 0.0
        %341 = vmatpush1.xpose.msra.mxu0 0.0
        %342 = vmatprep.subr.mxu0 0.0
        %343 = vmatpush1.xpose.msra.mxu0 0.0
        %344 = vmatprep.subr.mxu0 0.0
        %345 = vmatpush1.xpose.msra.mxu0 0.0
        %346 = vmatprep.subr.mxu0 0.0
        %347 = vmatpush1.xpose.msra.mxu0 0.0
        %348 = vmatprep.subr.mxu0 0.0
        %349 = vmatpush1.xpose.msra.mxu0 0.0
        %350 = vmatprep.subr.mxu0 0.0
        %351 = vmatpush1.xpose.msra.mxu0 0.0
        %352 = vmatprep.subr.mxu0 0.0
        %353 = vmatpush1.xpose.msra.mxu0 0.0
        %354 = vmatprep.subr.mxu0 0.0
        %355 = vmatpush1.xpose.msra.mxu0 0.0
        %356 = vmatprep.subr.mxu0 0.0
        %357 = vmatpush1.xpose.msra.mxu0 0.0
        %358 = vmatprep.subr.mxu0 0.0
        %359 = vmatpush1.xpose.msra.mxu0 0.0
        %360 = vmatprep.subr.mxu0 0.0
        %361 = vmatpush1.xpose.msra.mxu0 0.0
        %362 = vmatprep.subr.mxu0 0.0
        %363 = vmatpush1.xpose.msra.mxu0 0.0
        %364 = vmatprep.mubr.f32.mxu0 0.0
        %365 = vmatmul.mubr.f32.gmra.mrb[0].mxu0 %v298
        %v366 = vpop.f32.mrb[0].mxu0
        %v367 = vadd.f32 0.0, %v366
        %v368 = vpop.f32.mrb[0].mxu0
        %369 = vdwg.mxu0
        %v370 = vld [vmem:[#allocation3] sm:$0xff]
        %vm371 = vcmask 64512
        %v372 = vsel %vm371, %v367, -inf
        %373 = vmax.xlane.f32.xlu0 %v372
        %v374 = vpop.xlane.xlu0 %373
        %v375 = vmax.f32 %v370, %v374
        %v376 = vsub.f32 %v370, %v375
        %v377 = vmul.f32 %v376, 1.442695
        %v378 = vpow.pop %v377
        %380 = vset.pattern.permute.xlu0 0
        %381 = vperm.xlu0 %380, %v375
        %v382 = vpop.permute.xlu0 %381
        %v384 = vsub.f32 %v367, %v382
        %v385 = vmul.f32 %v384, 1.442695
        %v386 = vpow.pop %v385
        %v387 = vld [vmem:[#allocation4] sm:$0xff]
        %v388 = vmul.f32 %v378, %v387
        %v389 = vsel %vm371, %v386, 0.0
        %390 = vadd.xlane.f32.xlu0 %v389
        %v391 = vpop.xlane.xlu0 %390
        %v392 = vadd.f32 %v388, %v391
        %vm393 = vcmask 7168
        %394 = vst.msk [vmem:[#allocation4] sm:$0xff] %vm393, %v392
        %v395 = vld [vmem:[#allocation5] sm:$0xff]
        %397 = vset.pattern.permute.xlu0 0
        %398 = vperm.xlu0 %397, %v378
        %v399 = vpop.permute.xlu0 %398
        %v401 = vmul.f32 %v399, %v395
        %v402 = vld [vmem:[%s254] sm:$0xff]
        %v404 = vsel %vm371, %v386, 0
        %406 = vmatprep.subr.mxu0 0.0
        %407 = vmatpush1.msra.mxu0 %v402
        %408 = vmatprep.subr.mxu0 0.0
        %409 = vmatpush1.msra.mxu0 0.0
        %410 = vmatprep.subr.mxu0 0.0
        %411 = vmatpush1.msra.mxu0 0.0
        %412 = vmatprep.subr.mxu0 0.0
        %413 = vmatpush1.msra.mxu0 0.0
        %414 = vmatprep.subr.mxu0 0.0
        %415 = vmatpush1.msra.mxu0 0.0
        %416 = vmatprep.subr.mxu0 0.0
        %417 = vmatpush1.msra.mxu0 0.0
        %418 = vmatprep.subr.mxu0 0.0
        %419 = vmatpush1.msra.mxu0 0.0
        %420 = vmatprep.subr.mxu0 0.0
        %421 = vmatpush1.msra.mxu0 0.0
        %422 = vmatprep.subr.mxu0 0.0
        %423 = vmatpush1.msra.mxu0 0.0
        %424 = vmatprep.subr.mxu0 0.0
        %425 = vmatpush1.msra.mxu0 0.0
        %426 = vmatprep.subr.mxu0 0.0
        %427 = vmatpush1.msra.mxu0 0.0
        %428 = vmatprep.subr.mxu0 0.0
        %429 = vmatpush1.msra.mxu0 0.0
        %430 = vmatprep.subr.mxu0 0.0
        %431 = vmatpush1.msra.mxu0 0.0
        %432 = vmatprep.subr.mxu0 0.0
        %433 = vmatpush1.msra.mxu0 0.0
        %434 = vmatprep.subr.mxu0 0.0
        %435 = vmatpush1.msra.mxu0 0.0
        %436 = vmatprep.subr.mxu0 0.0
        %437 = vmatpush1.msra.mxu0 0.0
        %438 = vmatprep.subr.mxu0 0.0
        %439 = vmatpush1.msra.mxu0 0.0
        %440 = vmatprep.subr.mxu0 0.0
        %441 = vmatpush1.msra.mxu0 0.0
        %442 = vmatprep.subr.mxu0 0.0
        %443 = vmatpush1.msra.mxu0 0.0
        %444 = vmatprep.subr.mxu0 0.0
        %445 = vmatpush1.msra.mxu0 0.0
        %446 = vmatprep.subr.mxu0 0.0
        %447 = vmatpush1.msra.mxu0 0.0
        %448 = vmatprep.subr.mxu0 0.0
        %449 = vmatpush1.msra.mxu0 0.0
        %450 = vmatprep.subr.mxu0 0.0
        %451 = vmatpush1.msra.mxu0 0.0
        %452 = vmatprep.subr.mxu0 0.0
        %453 = vmatpush1.msra.mxu0 0.0
        %454 = vmatprep.subr.mxu0 0.0
        %455 = vmatpush1.msra.mxu0 0.0
        %456 = vmatprep.subr.mxu0 0.0
        %457 = vmatpush1.msra.mxu0 0.0
        %458 = vmatprep.subr.mxu0 0.0
        %459 = vmatpush1.msra.mxu0 0.0
        %460 = vmatprep.subr.mxu0 0.0
        %461 = vmatpush1.msra.mxu0 0.0
        %462 = vmatprep.subr.mxu0 0.0
        %463 = vmatpush1.msra.mxu0 0.0
        %464 = vmatprep.subr.mxu0 0.0
        %465 = vmatpush1.msra.mxu0 0.0
        %466 = vmatprep.subr.mxu0 0.0
        %467 = vmatpush1.msra.mxu0 0.0
        %468 = vmatprep.subr.mxu0 0.0
        %469 = vmatpush1.msra.mxu0 0.0
        %470 = vmatprep.mubr.f32.mxu0 0.0
        %471 = vmatmul.mubr.f32.gmra.mrb[0].mxu0 %v404
        %v472 = vpop.f32.mrb[0].mxu0
        %v473 = vadd.f32 0.0, %v472
        %v474 = vpop.f32.mrb[0].mxu0
        %475 = vdwg.mxu0
        %v476 = vadd.f32 %v401, %v473
        %477 = vst [vmem:[#allocation5] sm:$0xff] %v476
        %478 = vst.msk [vmem:[#allocation3] sm:$0xff] %vm393, %v375
        // Predicated region
        $region49: #{tpu_custom_call.1} parent=31 // pred_check
          %p479 = pneg %p287
        $region50: #{tpu_custom_call.1} parent=31 // pred_check_branch
          %481 = sbr.rel (%p479) target = $region52
        $region51: #{tpu_custom_call.1} parent=31 // pred_region
          %v482 = vld [vmem:[#allocation4] sm:$0xff]
          %v483 = vrcp.pop %v482
          %v484 = vmul.f32 %v482, %v483
          %v485 = vsub.f32 2.0, %v484
          %v486 = vmul.f32 %v483, %v485
          %v487 = vld [vmem:[#allocation5] sm:$0xff]
          %489 = vset.pattern.permute.xlu0 0
          %490 = vperm.xlu0 %489, %v486
          %v491 = vpop.permute.xlu0 %490
          %v493 = vmul.f32 %v487, %v491
          %494 = vst [vmem:[%s286] sm:$0xff] %v493
        $region52: #{tpu_custom_call.1} parent=31 // pred_fallthru
          _
        %s495 = sand.u32 %s136, 1
        %s496 = scalar_lea.sflag [#allocation8], %s495
        %s497 = sand.u32 %s136, 1
        %s498 = smul.addr %s497, 8
        %s499 = scalar_lea.vmem [#allocation12], %s498
        // Predicated region
        $region53: #{tpu_custom_call.1} parent=31 // pred_check
          %p500 = pneg %p146
        $region54: #{tpu_custom_call.1} parent=31 // pred_check_branch
          %502 = sbr.rel (%p500) target = $region56
        $region55: #{tpu_custom_call.1} parent=31 // pred_region
          %s504 = ssub.s32 128, 128
          %505 = vsyncadd %s496, %s504
          %s506 = sadd.s32 %s29, %s28
          %s507 = smul.addr %s506, 128
          %s508 = scalar_lea.hbm %s3, %s507
          %s510 = sshll.u32 %s499, 4
          %s511 = int_to_ptr.vmem [resolvable:$true] %s510
          %513 = dma.vmem_to_hbm [thread:$0]  %s511, 128, %s508, %s496
        $region56: #{tpu_custom_call.1} parent=31 // pred_fallthru
          _
      $region32: #{tpu_custom_call.1} parent=5 // pred_fallthru
        _
      %p514 = scmp.le.s32.totalorder 2, %s18
      // Predicated region
      $region57: #{tpu_custom_call.1} parent=5 // pred_check
        %p515 = pneg %p514
      $region58: #{tpu_custom_call.1} parent=5 // pred_check_branch
        %517 = sbr.rel (%p515) target = $region60
      $region59: #{tpu_custom_call.1} parent=5 // pred_region
        %s518 = ssub.s32 %s18, 2
        // Predicated region
        $region61: #{tpu_custom_call.1} parent=59 // pred_check
          %p519 = pneg %p152
        $region62: #{tpu_custom_call.1} parent=59 // pred_check_branch
          %521 = sbr.rel (%p519) target = $region64
        $region63: #{tpu_custom_call.1} parent=59 // pred_region
          %s522 = sand.u32 %s137, 1
          %s523 = scalar_lea.sflag [#allocation8], %s522
          %s524 = sand.u32 %s137, 1
          %s525 = smul.addr %s524, 8
          %s526 = scalar_lea.vmem [#allocation12], %s525
          %527 = dma.done %s523, 128
        $region64: #{tpu_custom_call.1} parent=59 // pred_fallthru
          _
      $region60: #{tpu_custom_call.1} parent=5 // pred_fallthru
        _
    $region6: #{tpu_custom_call.1} parent=1 // loop_footer
      %s22 = sadd.s32 1, %s18
    $region7: #{tpu_custom_call.1} parent=1 // loop_footer_branch
      %17 = sbr.rel target = $region3
    $region8: #{tpu_custom_call.1} parent=1 // loop_exit
      _
    %528 = vsyncpa [#allocation7], 1
    %s529 = scalar_lea.sflag [#allocation7], 1
    %530 = vsyncpa %s529, 1
    %531 = vsyncpa [#allocation10], 1
    %s532 = scalar_lea.sflag [#allocation10], 1
    %533 = vsyncpa %s532, 1
    %534 = vsyncpa [#allocation8], 1
    %s535 = scalar_lea.sflag [#allocation8], 1
    %536 = vsyncpa %s535, 1

</llo_original>
